<compile_context>
chip_gen: v5e
topology: v5e:2x2
jax: 0.10.0
libtpu: 0.0.40
codegen_flags: <defaults>
</compile_context>

<pallas_src>
import jax
import jax.numpy as jnp
from jax.experimental import pallas as pl
from jax.experimental.pallas import tpu as pltpu


def _identity_kernel(x_ref, o_ref):
    # Straight VMEM copy of the current tile.
    o_ref[...] = x_ref[...]


def pallas_identity_copy(x):
    """Materialize a copy of `x` through a tiled, lane-dense Pallas kernel."""
    x = jnp.asarray(x)
    if x.ndim == 0 or x.size == 0:
        # Degenerate shapes: nothing to tile; identity is exact.
        return x

    orig_shape = x.shape
    size = x.size

    # Lane-dense 2D view: widest lane width (multiple of 128) that divides the
    # total element count; fall back to the natural trailing dim for ragged
    # sizes (full-extent last dim keeps the (8,128) block rule satisfied).
    lane = next((c for c in (512, 256, 128) if size % c == 0), orig_shape[-1])
    rows = size // lane
    x2d = x.reshape(rows, lane)

    # Row tiling: ~2 MiB per tile, sublane-aligned (multiple of 8), so that
    # double-buffered input+output (4 live tiles) stays well under VMEM on
    # every generation while the pipeline stays deep enough to hide DMA.
    bytes_per_row = lane * x2d.dtype.itemsize
    if rows < 8:
        row_block = rows                          # full-extent block
    else:
        target = max(8, (2 * 1024 * 1024) // max(bytes_per_row, 1))
        row_block = min(rows, target)
        row_block -= row_block % 8                # keep sublane-aligned
        if row_block >= rows:
            row_block = rows                      # full-extent block
    grid = (pl.cdiv(rows, row_block),)

    out2d = pl.pallas_call(
        _identity_kernel,
        out_shape=jax.ShapeDtypeStruct((rows, lane), x2d.dtype),
        grid=grid,
        in_specs=[pl.BlockSpec((row_block, lane), lambda i: (i, 0))],
        out_specs=pl.BlockSpec((row_block, lane), lambda i: (i, 0)),
        # Alias input -> output: no new HBM allocation; copy elidable when the
        # caller donates the buffer under jit.
        input_output_aliases={0: 0},
        compiler_params=pltpu.CompilerParams(
            dimension_semantics=("parallel",)),
    )(x2d)
    return out2d.reshape(orig_shape)


def noop_observer_forward(x, *, materialize=False):
    """Pallas equivalent of NoopObserver.forward: returns x unchanged.

    The 'dtype=float16' configuration of NoopObserver only affects downstream
    .from_float() conversion, not the forward pass, so it is not applied here.
    Default path launches no kernel at all (pure identity); set
    materialize=True to route through the Pallas copy kernel.
    """
    if materialize:
        return pallas_identity_copy(x)
    return x


class NoopObserver:
    """JAX/Pallas port of torch.quantization.observer.NoopObserver."""

    def __init__(self, dtype=jnp.float16, materialize=False):
        if dtype != jnp.float16:
            raise ValueError(
                "Only float16 quantization can be used without calibration process"
            )
        self.dtype = dtype
        self.materialize = materialize

    def __call__(self, x):
        return noop_observer_forward(x, materialize=self.materialize)

    forward = __call__

    def calculate_qparams(self):
        raise Exception("calculate_qparams should not be called for NoopObserver")

    def get_qparams(self):
        return self.calculate_qparams()


if __name__ == "__main__":
    key = jax.random.PRNGKey(0)
    # NCHW input as a conv activation would be observed: batch=2, channels=4, 16x16
    x = jax.random.normal(key, (2, 4, 16, 16), dtype=jnp.float32)

    # 1) Default observer path: true no-op (no kernel launched).
    obs = NoopObserver()
    y = obs(x)
    jax.block_until_ready(y)
    assert y.shape == x.shape and y.dtype == x.dtype
    assert bool(jnp.all(y == x))

    # 2) Pallas identity-copy kernel (lane-dense reshape, tiled, aliased out).
    obs_k = NoopObserver(materialize=True)
    yk = obs_k(x)
    jax.block_until_ready(yk)
    assert yk.shape == x.shape and yk.dtype == x.dtype
    assert bool(jnp.all(yk == x))

    # 3) Ragged fallback path (total size not a multiple of 128).
    x2 = jax.random.normal(jax.random.PRNGKey(1), (2, 3, 5, 7), dtype=jnp.float32)
    y2 = pallas_identity_copy(x2)
    jax.block_until_ready(y2)
    assert y2.shape == x2.shape and y2.dtype == x2.dtype
    assert bool(jnp.all(y2 == x2))

    print("KERNEL_OK")
</pallas_src>

<mosaic_0001>
module attributes {stable_mosaic.version = 11 : i64} {
  func.func @_identity_kernel(%arg0: i32, %arg1: memref<4x512xf32, #tpu.memory_space<vmem>>, %arg2: memref<4x512xf32, #tpu.memory_space<vmem>>) attributes {dimension_semantics = [#tpu.dimension_semantics<parallel>], iteration_bounds = array<i64: 1>, scalar_prefetch = 0 : i64, scratch_operands = 0 : i64, tpu.core_type = #tpu.core_type<tc>, window_params = [{transform_indices = @transform_0, window_bounds = array<i64: 4, 512>}, {transform_indices = @transform_1, window_bounds = array<i64: 4, 512>}]} {
    %c0 = arith.constant 0 : index
    %c0_0 = arith.constant 0 : index
    %0 = vector.load %arg1[%c0, %c0_0] : memref<4x512xf32, #tpu.memory_space<vmem>>, vector<4x512xf32>
    %c0_1 = arith.constant 0 : index
    %c0_2 = arith.constant 0 : index
    %1 = vector.load %arg2[%c0_1, %c0_2] : memref<4x512xf32, #tpu.memory_space<vmem>>, vector<4x512xf32>
    tpu.vector_store %arg2[%c0_1, %c0_2], %0 {strides = array<i32>} : memref<4x512xf32, #tpu.memory_space<vmem>>, vector<4x512xf32>,
    return
  }
  func.func @transform_0(%arg0: i32) -> (i32, i32) {
    %c0_i32 = arith.constant 0 : i32
    %c0_i32_0 = arith.constant 0 : i32
    return %arg0, %c0_i32 : i32, i32
  }
  func.func @transform_1(%arg0: i32) -> (i32, i32) {
    %c0_i32 = arith.constant 0 : i32
    %c0_i32_0 = arith.constant 0 : i32
    return %arg0, %c0_i32 : i32, i32
  }
}

</mosaic_0001>

<llo_original>
// kernel: tpu_custom_call.1
$region0: #{tpu_custom_call.1}
  #allocation0 [shape = 'u32[]', space=smem, size = 0x4, offset = 0x4, fixed_abs, tag = 'smem constant byte address 0x4 - core index']
  #allocation1 [shape = 'u32[72,128]{1,0:T(1,128)}', space=vmem, size = 0x9000, scoped, tag = 'internal scratch']
  %s0 = inlined_call_operand.hbm [shape: f32[4,512], index: 0, kind: input, shape index: {}, may-alias: {0,1}]
  %s1 = inlined_call_operand.hbm [shape: f32[4,512], index: 1, kind: output, shape index: {}, may-alias: {0,1}]
  %s2 = sld [smem:[#allocation0]]
  $region18: #{tpu_custom_call.1} parent=0
    _
  %s4 = ssub.s32 1, %s2
  %s5 = scalar_select 0, %s4, %s2
  $region1: #{tpu_custom_call.1} parent=0
    #allocation2 [shape = 'u8[8192]{0}', space=vmem, size = 0x2000, scoped, tag = 'input window, operand 0, single buffered']
    #allocation3 [shape = 's32[1]{0}', space=sflag, size = 0x4, scoped, tag = 'scoped memory for tpu_custom_call.1']
    #allocation4 [shape = 's32[1]{0}', space=sflag, size = 0x4, scoped, tag = 'scoped memory for tpu_custom_call.1']
    #allocation5 [shape = 'u8[8192]{0}', space=vmem, size = 0x2000, scoped, tag = 'output window, operand 0, single buffered']
    %6 = vsyncpa [#allocation3], 0
    %7 = vsyncpa [#allocation4], 0
    // Predicated region
    $region2: #{tpu_custom_call.1} parent=1 // pred_check
      _
    $region3: #{tpu_custom_call.1} parent=1 // pred_check_branch
      %9 = sbr.rel (0) target = $region5
    $region4: #{tpu_custom_call.1} parent=1 // pred_region
      %11 = vsyncadd [#allocation3], 0
      %s13 = sshll.u32 %s0, 4
      %s14 = int_to_ptr.hbm [resolvable:$true] %s13
      %s15 = sshll.u32 [#allocation2], 4
      %s16 = int_to_ptr.vmem [resolvable:$true] %s15
      %18 = dma.hbm_to_vmem [thread:$0]  %s14, 256, %s16, [#allocation3]
    $region5: #{tpu_custom_call.1} parent=1 // pred_fallthru
      _
    // Predicated region
    $region6: #{tpu_custom_call.1} parent=1 // pred_check
      _
    $region7: #{tpu_custom_call.1} parent=1 // pred_check_branch
      %20 = sbr.rel (0) target = $region9
    $region8: #{tpu_custom_call.1} parent=1 // pred_region
      %22 = dma.done [#allocation3], 256
    $region9: #{tpu_custom_call.1} parent=1 // pred_fallthru
      _
    %v23 = vld [vmem:[#allocation2] sm:$0xff]
    %v24 = vld [vmem:[#allocation2 + $0x8] sm:$0xff]
    %25 = vst [vmem:[#allocation5] sm:$0xff] %v23
    %26 = vst [vmem:[#allocation5 + $0x8] sm:$0xff] %v24
    // Predicated region
    $region10: #{tpu_custom_call.1} parent=1 // pred_check
      _
    $region11: #{tpu_custom_call.1} parent=1 // pred_check_branch
      %28 = sbr.rel (0) target = $region13
    $region12: #{tpu_custom_call.1} parent=1 // pred_region
      %30 = vsyncadd [#allocation4], 0
      %s32 = sshll.u32 [#allocation5], 4
      %s33 = int_to_ptr.vmem [resolvable:$true] %s32
      %s34 = sshll.u32 %s1, 4
      %s35 = int_to_ptr.hbm [resolvable:$true] %s34
      %37 = dma.vmem_to_hbm [thread:$0]  %s33, 256, %s35, [#allocation4]
    $region13: #{tpu_custom_call.1} parent=1 // pred_fallthru
      _
    // Predicated region
    $region14: #{tpu_custom_call.1} parent=1 // pred_check
      _
    $region15: #{tpu_custom_call.1} parent=1 // pred_check_branch
      %39 = sbr.rel (0) target = $region17
    $region16: #{tpu_custom_call.1} parent=1 // pred_region
      %41 = dma.done [#allocation4], 256
    $region17: #{tpu_custom_call.1} parent=1 // pred_fallthru
      _
    %42 = vsyncpa [#allocation3], 1
    %43 = vsyncpa [#allocation4], 1

</llo_original>
